<compile_context>
chip_gen: v5e
topology: v5e:2x2
jax: 0.10.0
libtpu: 0.0.40
codegen_flags: <defaults>
</compile_context>

<pallas_src>
import functools

import jax
import jax.numpy as jnp
from jax import lax
from jax.experimental import pallas as pl
from jax.experimental.pallas import tpu as pltpu


def _round_up(x, m):
    return (x + m - 1) // m * m


# --------------------------------------------------------------------------
# Fast path: positives defined by an id vector (labels, or sample index for
# SimCLR); neg_mask is all-ones.  No N x N arrays ever touch HBM.
# --------------------------------------------------------------------------
def _supcon_ids_kernel(ids_row_ref, ids_col_ref, feat_ref, out_ref, *,
                       temperature, base_temperature, n_valid, tm):
    i = pl.program_id(0)
    n_pad = feat_ref.shape[0]
    row0 = pl.multiple_of(i * tm, tm)

    feat_all = feat_ref[...]                       # (n_pad, d) f32, resident
    feat_tile = feat_ref[pl.ds(row0, tm), :]       # (tm, d) anchor rows

    # anchor_dot_contrast on the MXU; contract feature axis directly (no .T).
    adc = lax.dot_general(
        feat_tile, feat_all,
        dimension_numbers=(((1,), (1,)), ((), ())),
        preferred_element_type=jnp.float32,
    ) * jnp.float32(1.0 / temperature)             # (tm, n_pad)

    col = lax.broadcasted_iota(jnp.int32, (tm, n_pad), 1)
    row = lax.broadcasted_iota(jnp.int32, (tm, n_pad), 0) + i * tm
    col_valid = col < n_valid

    # Keep padded columns out of the row-max / exp stream.
    adc = jnp.where(col_valid, adc, jnp.float32(-1e30))
    logits_max = jnp.max(adc, axis=1, keepdims=True)
    logits = adc - logits_max

    # logits_mask: all-ones neg_mask with the main diagonal and padding zeroed.
    logits_mask = jnp.where(jnp.logical_and(col_valid, row != col),
                            jnp.float32(1.0), jnp.float32(0.0))
    # Positive mask from ids (labels, or sample index for SimCLR).
    pos = (ids_row_ref[...] == ids_col_ref[...]).astype(jnp.float32)
    mask = pos * logits_mask

    exp_logits = jnp.exp(logits) * logits_mask
    log_denom = jnp.log(jnp.sum(exp_logits, axis=1, keepdims=True))   # (tm, 1)

    # sum(mask*(logits - log_denom)) == sum(mask*logits) - den*log_denom
    den = jnp.sum(mask, axis=1, keepdims=True)
    num = jnp.sum(mask * logits, axis=1, keepdims=True) - den * log_denom
    # Plain divide (den is only (tm,1)); pl.reciprocal(approx=True) would also
    # work if a few-ULP error is acceptable.
    mean_log_prob_pos = num / den

    loss_rows = jnp.float32(-(temperature / base_temperature)) * mean_log_prob_pos

    # Zero padded anchor rows (their den==0 NaN lives only in the discarded
    # branch of the select).
    row_ids = lax.broadcasted_iota(jnp.int32, (tm, 1), 0) + i * tm
    out_ref[...] = jnp.where(row_ids < n_valid, loss_rows, jnp.float32(0.0))


# --------------------------------------------------------------------------
# General path: explicit user mask / neg_mask, streamed as int8 row tiles.
# --------------------------------------------------------------------------
def _supcon_mask_kernel(feat_ref, mask_ref, negmask_ref, out_ref, *,
                        temperature, base_temperature, n_valid, tm):
    i = pl.program_id(0)
    n_pad = feat_ref.shape[0]
    row0 = pl.multiple_of(i * tm, tm)

    feat_all = feat_ref[...]
    feat_tile = feat_ref[pl.ds(row0, tm), :]

    adc = lax.dot_general(
        feat_tile, feat_all,
        dimension_numbers=(((1,), (1,)), ((), ())),
        preferred_element_type=jnp.float32,
    ) * jnp.float32(1.0 / temperature)

    col = lax.broadcasted_iota(jnp.int32, (tm, n_pad), 1)
    row = lax.broadcasted_iota(jnp.int32, (tm, n_pad), 0) + i * tm
    col_valid = col < n_valid

    adc = jnp.where(col_valid, adc, jnp.float32(-1e30))
    logits_max = jnp.max(adc, axis=1, keepdims=True)
    logits = adc - logits_max

    negm = negmask_ref[...].astype(jnp.float32)
    logits_mask = jnp.where(jnp.logical_and(col_valid, row != col),
                            negm, jnp.float32(0.0))
    mask = mask_ref[...].astype(jnp.float32) * logits_mask

    exp_logits = jnp.exp(logits) * logits_mask
    log_denom = jnp.log(jnp.sum(exp_logits, axis=1, keepdims=True))

    den = jnp.sum(mask, axis=1, keepdims=True)
    num = jnp.sum(mask * logits, axis=1, keepdims=True) - den * log_denom
    mean_log_prob_pos = num / den

    loss_rows = jnp.float32(-(temperature / base_temperature)) * mean_log_prob_pos
    row_ids = lax.broadcasted_iota(jnp.int32, (tm, 1), 0) + i * tm
    out_ref[...] = jnp.where(row_ids < n_valid, loss_rows, jnp.float32(0.0))


# --------------------------------------------------------------------------
# Wrapper
# --------------------------------------------------------------------------
def supcon_loss(features, labels=None, mask=None, neg_mask=None, *,
                temperature=0.07, contrast_mode='all', base_temperature=0.07):
    """Pallas implementation of SupConLoss.forward (contrast_mode='all')."""
    features = jnp.asarray(features)
    if features.ndim < 3:
        raise ValueError("`features` needs to be [bsz, n_views, ...]")
    if features.ndim > 3:
        features = features.reshape(features.shape[0], features.shape[1], -1)
    bsz, n_views, dim = features.shape

    if contrast_mode != 'all':
        # TODO(synk): contrast_mode='one' needs a rectangular [bsz, N] kernel.
        raise NotImplementedError(
            "Pallas SupConLoss kernel only supports contrast_mode='all'")
    if labels is not None and mask is not None:
        raise ValueError("Cannot define both `labels` and `mask`")

    # torch.cat(torch.unbind(features, dim=1), dim=0): view-major stacking.
    contrast_feature = jnp.transpose(features, (1, 0, 2)).reshape(
        n_views * bsz, dim).astype(jnp.float32)

    n_total = n_views * bsz
    n_pad = _round_up(n_total, 128)          # lane-dense / MXU-aligned extent
    tm = 256 if n_pad % 256 == 0 else 128    # anchor-row tile
    n_tiles = n_pad // tm

    feat = jnp.zeros((n_pad, dim), jnp.float32).at[:n_total, :].set(
        contrast_feature)

    use_fast_path = (mask is None) and (neg_mask is None)

    if use_fast_path:
        # Positives defined by labels (or sample index for SimCLR).
        if labels is None:
            ids_b = jnp.arange(bsz, dtype=jnp.int32)
        else:
            labels = jnp.asarray(labels).reshape(-1)
            if labels.shape[0] != bsz:
                raise ValueError("Num of labels does not match num of features")
            ids_b = labels.astype(jnp.int32)
        ids = jnp.tile(ids_b, (n_views,))     # view-major, matches contrast_feature
        ids_row = jnp.full((n_pad, 1), -1, jnp.int32).at[:n_total, 0].set(ids)
        ids_col = jnp.full((1, n_pad), -2, jnp.int32).at[0, :n_total].set(ids)

        kernel = functools.partial(
            _supcon_ids_kernel,
            temperature=float(temperature),
            base_temperature=float(base_temperature),
            n_valid=n_total, tm=tm)
        in_specs = [
            pl.BlockSpec((tm, 1), lambda i: (i, 0)),        # anchor-row ids
            pl.BlockSpec((1, n_pad), lambda i: (0, 0)),     # contrast ids (resident)
            pl.BlockSpec((n_pad, dim), lambda i: (0, 0)),   # features (resident)
        ]
        args = (ids_row, ids_col, feat)
        extra_mask_bytes = 0
    else:
        # Explicit mask / neg_mask: stream row tiles of int8 masks.
        if mask is None:
            if labels is None:
                mask_b = jnp.eye(bsz, dtype=jnp.float32)
            else:
                labels = jnp.asarray(labels).reshape(-1, 1)
                if labels.shape[0] != bsz:
                    raise ValueError("Num of labels does not match num of features")
                mask_b = (labels == labels.T).astype(jnp.float32)
        else:
            mask_b = jnp.asarray(mask, dtype=jnp.float32)
        if neg_mask is None:
            negmask_b = jnp.ones_like(mask_b)
        else:
            negmask_b = jnp.asarray(neg_mask, dtype=jnp.float32)

        # Masks are 0/1 indicators by contract -> int8 transport (4x less HBM).
        mask_full = jnp.tile(mask_b, (n_views, n_views)).astype(jnp.int8)
        negmask_full = jnp.tile(negmask_b, (n_views, n_views)).astype(jnp.int8)
        mask_p = jnp.zeros((n_pad, n_pad), jnp.int8).at[
            :n_total, :n_total].set(mask_full)
        negmask_p = jnp.zeros((n_pad, n_pad), jnp.int8).at[
            :n_total, :n_total].set(negmask_full)

        kernel = functools.partial(
            _supcon_mask_kernel,
            temperature=float(temperature),
            base_temperature=float(base_temperature),
            n_valid=n_total, tm=tm)
        in_specs = [
            pl.BlockSpec((n_pad, dim), lambda i: (0, 0)),   # features (resident)
            pl.BlockSpec((tm, n_pad), lambda i: (i, 0)),    # positive-mask tile
            pl.BlockSpec((tm, n_pad), lambda i: (i, 0)),    # negative-mask tile
        ]
        args = (feat, mask_p, negmask_p)
        extra_mask_bytes = 2 * 2 * tm * n_pad  # two int8 inputs, double-buffered

    # Rough VMEM estimate; raise the scoped limit only when the defaults
    # (16 MiB v5e / 32 MiB v6e,v7x) would be too small.
    est_vmem = 2 * n_pad * dim * 4 + 10 * tm * n_pad * 4 + extra_mask_bytes
    cp_kwargs = dict(dimension_semantics=("parallel",))
    if est_vmem > 16 * 1024 * 1024:
        cp_kwargs["vmem_limit_bytes"] = int(min(est_vmem * 1.25,
                                                100 * 1024 * 1024))
    compiler_params = pltpu.CompilerParams(**cp_kwargs)

    row_losses = pl.pallas_call(
        kernel,
        out_shape=jax.ShapeDtypeStruct((n_pad, 1), jnp.float32),
        grid=(n_tiles,),
        in_specs=in_specs,
        out_specs=pl.BlockSpec((tm, 1), lambda i: (i, 0)),
        compiler_params=compiler_params,
    )(*args)

    # loss.view(anchor_count, bsz).mean() == mean over all N anchors.
    return jnp.sum(row_losses) / n_total


# --------------------------------------------------------------------------
# Pure-JAX reference mirroring the PyTorch code (contrast_mode='all').
# --------------------------------------------------------------------------
def _supcon_loss_ref(features, labels=None, mask=None, neg_mask=None, *,
                     temperature=0.07, base_temperature=0.07):
    bsz, n_views, dim = features.shape
    if labels is None and mask is None:
        mask = jnp.eye(bsz, dtype=jnp.float32)
    elif labels is not None:
        labels = jnp.asarray(labels).reshape(-1, 1)
        mask = (labels == labels.T).astype(jnp.float32)
    else:
        mask = jnp.asarray(mask, dtype=jnp.float32)
    if neg_mask is None:
        neg_mask = jnp.ones_like(mask)
    else:
        neg_mask = jnp.asarray(neg_mask, dtype=jnp.float32)

    cf = jnp.transpose(features, (1, 0, 2)).reshape(n_views * bsz, dim)
    adc = (cf @ cf.T) / temperature
    logits = adc - jnp.max(adc, axis=1, keepdims=True)
    n = n_views * bsz
    mask = jnp.tile(mask, (n_views, n_views))
    neg_mask = jnp.tile(neg_mask, (n_views, n_views))
    logits_mask = neg_mask * (1.0 - jnp.eye(n, dtype=jnp.float32))
    mask = mask * logits_mask
    exp_logits = jnp.exp(logits) * logits_mask
    log_prob = logits - jnp.log(exp_logits.sum(1, keepdims=True))
    mlpp = (mask * log_prob).sum(1) / mask.sum(1)
    loss = -(temperature / base_temperature) * mlpp
    return loss.mean()


if __name__ == "__main__":
    key = jax.random.PRNGKey(0)
    bsz, n_views, dim = 8, 2, 128
    kf, _ = jax.random.split(key)
    features = jax.random.normal(kf, (bsz, n_views, dim), dtype=jnp.float32)
    # L2-normalize features along the feature dim (standard for SupCon inputs).
    features = features / jnp.linalg.norm(features, axis=-1, keepdims=True)
    labels = jnp.array([0, 1, 0, 1, 2, 2, 3, 3], dtype=jnp.int32)

    # 1) Supervised path (labels -> in-kernel id mask, no N^2 HBM traffic).
    loss = jax.block_until_ready(
        supcon_loss(features, labels=labels,
                    temperature=0.07, base_temperature=0.07))
    ref = _supcon_loss_ref(features, labels=labels,
                           temperature=0.07, base_temperature=0.07)
    assert jnp.allclose(loss, ref, rtol=1e-4, atol=1e-4), (loss, ref)

    # 2) SimCLR (unsupervised) path: no labels / mask.
    loss_u = jax.block_until_ready(supcon_loss(features))
    ref_u = _supcon_loss_ref(features)
    assert jnp.allclose(loss_u, ref_u, rtol=1e-4, atol=1e-4), (loss_u, ref_u)

    # 3) Explicit mask + neg_mask path (streamed int8 row tiles).
    mask_b = (labels[:, None] == labels[None, :]).astype(jnp.float32)
    neg_b = jnp.ones((bsz, bsz), jnp.float32).at[0, 1].set(0.0).at[3, 2].set(0.0)
    loss_m = jax.block_until_ready(
        supcon_loss(features, mask=mask_b, neg_mask=neg_b))
    ref_m = _supcon_loss_ref(features, mask=mask_b, neg_mask=neg_b)
    assert jnp.allclose(loss_m, ref_m, rtol=1e-4, atol=1e-4), (loss_m, ref_m)

    print("KERNEL_OK")
</pallas_src>

<mosaic_0001>
module attributes {stable_mosaic.version = 11 : i64} {
  func.func @_supcon_ids_kernel(%arg0: i32, %arg1: memref<128x1xi32, #tpu.memory_space<vmem>>, %arg2: memref<1x128xi32, #tpu.memory_space<vmem>>, %arg3: memref<128x128xf32, #tpu.memory_space<vmem>>, %arg4: memref<128x1xf32, #tpu.memory_space<vmem>>) attributes {dimension_semantics = [#tpu.dimension_semantics<parallel>], iteration_bounds = array<i64: 1>, scalar_prefetch = 0 : i64, scratch_operands = 0 : i64, tpu.core_type = #tpu.core_type<tc>, window_params = [{transform_indices = @transform_0, window_bounds = array<i64: 128, 1>}, {pipeline_mode = #tpu.pipeline_mode<synchronous>, transform_indices = @transform_1, window_bounds = array<i64: 1, 128>}, {pipeline_mode = #tpu.pipeline_mode<synchronous>, transform_indices = @transform_2, window_bounds = array<i64: 128, 128>}, {transform_indices = @transform_3, window_bounds = array<i64: 128, 1>}]} {
    %c128_i32 = arith.constant 128 : i32
    %0 = arith.muli %arg0, %c128_i32 : i32
    %1 = tpu.assume_multiple %0, 128 : i32
    %c0 = arith.constant 0 : index
    %c0_0 = arith.constant 0 : index
    %2 = vector.load %arg3[%c0, %c0_0] : memref<128x128xf32, #tpu.memory_space<vmem>>, vector<128x128xf32>
    %3 = arith.index_cast %1 : i32 to index
    %c0_1 = arith.constant 0 : index
    %4 = vector.load %arg3[%3, %c0_1] : memref<128x128xf32, #tpu.memory_space<vmem>>, vector<128x128xf32>
    %cst = arith.constant dense<0.000000e+00> : vector<128x128xf32>
    %5 = tpu.matmul %4, %2, %cst {dimension_numbers = #tpu.dot_dimension_numbers<[1], [1], [0], [0], [0, 0, 1, 0], [], []>} : vector<128x128xf32>, vector<128x128xf32>, vector<128x128xf32> -> vector<128x128xf32>
    %cst_2 = arith.constant 14.2857141 : f32
    %6 = vector.broadcast %cst_2 : f32 to vector<128x128xf32>
    %7 = arith.mulf %5, %6 : vector<128x128xf32>
    %8 = tpu.iota {dimensions = array<i32: 1>} : vector<128x128xi32>
    %9 = tpu.iota {dimensions = array<i32: 0>} : vector<128x128xi32>
    %c128_i32_3 = arith.constant 128 : i32
    %10 = arith.muli %arg0, %c128_i32_3 : i32
    %11 = vector.broadcast %10 : i32 to vector<128x128xi32>
    %12 = arith.addi %9, %11 : vector<128x128xi32>
    %c16_i32 = arith.constant 16 : i32
    %13 = vector.broadcast %c16_i32 : i32 to vector<128x128xi32>
    %14 = arith.cmpi slt, %8, %13 : vector<128x128xi32>
    %cst_4 = arith.constant -1.000000e+30 : f32
    %15 = vector.broadcast %cst_4 : f32 to vector<128x128xf32>
    %16 = arith.select %14, %7, %15 : vector<128x128xi1>, vector<128x128xf32>
    %cst_5 = arith.constant dense<0xFF800000> : vector<128xf32>
    %17 = vector.multi_reduction <maximumf>, %16, %cst_5 [1] : vector<128x128xf32> to vector<128xf32>
    %18 = vector.shape_cast %17 : vector<128xf32> to vector<128x1xf32>
    %19 = vector.broadcast %18 : vector<128x1xf32> to vector<128x128xf32>
    %20 = arith.subf %16, %19 : vector<128x128xf32>
    %21 = arith.cmpi ne, %12, %8 : vector<128x128xi32>
    %22 = arith.andi %14, %21 : vector<128x128xi1>
    %cst_6 = arith.constant 1.000000e+00 : f32
    %cst_7 = arith.constant 0.000000e+00 : f32
    %23 = vector.broadcast %cst_6 : f32 to vector<128x128xf32>
    %24 = vector.broadcast %cst_7 : f32 to vector<128x128xf32>
    %25 = arith.select %22, %23, %24 : vector<128x128xi1>, vector<128x128xf32>
    %c0_8 = arith.constant 0 : index
    %c0_9 = arith.constant 0 : index
    %26 = vector.load %arg1[%c0_8, %c0_9] : memref<128x1xi32, #tpu.memory_space<vmem>>, vector<128x1xi32>
    %c0_10 = arith.constant 0 : index
    %c0_11 = arith.constant 0 : index
    %27 = vector.load %arg2[%c0_10, %c0_11] : memref<1x128xi32, #tpu.memory_space<vmem>>, vector<1x128xi32>
    %28 = vector.broadcast %26 : vector<128x1xi32> to vector<128x128xi32>
    %29 = vector.broadcast %27 : vector<1x128xi32> to vector<128x128xi32>
    %30 = arith.cmpi eq, %28, %29 : vector<128x128xi32>
    %31 = arith.extui %30 : vector<128x128xi1> to vector<128x128xi32>
    %32 = arith.sitofp %31 : vector<128x128xi32> to vector<128x128xf32>
    %33 = arith.mulf %32, %25 : vector<128x128xf32>
    %34 = math.exp %20 : vector<128x128xf32>
    %35 = arith.mulf %34, %25 : vector<128x128xf32>
    %cst_12 = arith.constant dense<0.000000e+00> : vector<128xf32>
    %36 = vector.multi_reduction <add>, %35, %cst_12 [1] : vector<128x128xf32> to vector<128xf32>
    %37 = vector.shape_cast %36 : vector<128xf32> to vector<128x1xf32>
    %38 = math.log %37 : vector<128x1xf32>
    %cst_13 = arith.constant dense<0.000000e+00> : vector<128xf32>
    %39 = vector.multi_reduction <add>, %33, %cst_13 [1] : vector<128x128xf32> to vector<128xf32>
    %40 = vector.shape_cast %39 : vector<128xf32> to vector<128x1xf32>
    %41 = arith.mulf %33, %20 : vector<128x128xf32>
    %cst_14 = arith.constant dense<0.000000e+00> : vector<128xf32>
    %42 = vector.multi_reduction <add>, %41, %cst_14 [1] : vector<128x128xf32> to vector<128xf32>
    %43 = vector.shape_cast %42 : vector<128xf32> to vector<128x1xf32>
    %44 = arith.mulf %40, %38 : vector<128x1xf32>
    %45 = arith.subf %43, %44 : vector<128x1xf32>
    %46 = arith.divf %45, %40 : vector<128x1xf32>
    %cst_15 = arith.constant -1.000000e+00 : f32
    %47 = vector.broadcast %cst_15 : f32 to vector<128x1xf32>
    %48 = arith.mulf %47, %46 : vector<128x1xf32>
    %49 = tpu.iota {dimensions = array<i32: 0>} : vector<128x1xi32>
    %c128_i32_16 = arith.constant 128 : i32
    %50 = arith.muli %arg0, %c128_i32_16 : i32
    %51 = vector.broadcast %50 : i32 to vector<128x1xi32>
    %52 = arith.addi %49, %51 : vector<128x1xi32>
    %c16_i32_17 = arith.constant 16 : i32
    %53 = vector.broadcast %c16_i32_17 : i32 to vector<128x1xi32>
    %54 = arith.cmpi slt, %52, %53 : vector<128x1xi32>
    %cst_18 = arith.constant 0.000000e+00 : f32
    %55 = vector.broadcast %cst_18 : f32 to vector<128x1xf32>
    %56 = arith.select %54, %48, %55 : vector<128x1xi1>, vector<128x1xf32>
    %c0_19 = arith.constant 0 : index
    %c0_20 = arith.constant 0 : index
    %57 = vector.load %arg4[%c0_19, %c0_20] : memref<128x1xf32, #tpu.memory_space<vmem>>, vector<128x1xf32>
    tpu.vector_store %arg4[%c0_19, %c0_20], %56 {strides = array<i32>} : memref<128x1xf32, #tpu.memory_space<vmem>>, vector<128x1xf32>,
    return
  }
  func.func @transform_0(%arg0: i32) -> (i32, i32) {
    %c0_i32 = arith.constant 0 : i32
    %c0_i32_0 = arith.constant 0 : i32
    return %arg0, %c0_i32 : i32, i32
  }
  func.func @transform_1(%arg0: i32) -> (i32, i32) {
    %c0_i32 = arith.constant 0 : i32
    %c0_i32_0 = arith.constant 0 : i32
    %c0_i32_1 = arith.constant 0 : i32
    return %c0_i32, %c0_i32_0 : i32, i32
  }
  func.func @transform_2(%arg0: i32) -> (i32, i32) {
    %c0_i32 = arith.constant 0 : i32
    %c0_i32_0 = arith.constant 0 : i32
    %c0_i32_1 = arith.constant 0 : i32
    return %c0_i32, %c0_i32_0 : i32, i32
  }
  func.func @transform_3(%arg0: i32) -> (i32, i32) {
    %c0_i32 = arith.constant 0 : i32
    %c0_i32_0 = arith.constant 0 : i32
    return %arg0, %c0_i32 : i32, i32
  }
}

</mosaic_0001>

<llo_original>
// kernel: tpu_custom_call.1
$region0: #{tpu_custom_call.1}
  #allocation0 [shape = 'u32[]', space=smem, size = 0x4, offset = 0x4, fixed_abs, tag = 'smem constant byte address 0x4 - core index']
  #allocation1 [shape = 'u32[72,128]{1,0:T(1,128)}', space=vmem, size = 0x9000, scoped, tag = 'internal scratch']
  %s0 = inlined_call_operand.vmem [shape: s32[128,1], index: 0, kind: input, shape index: {}]
  %s1 = inlined_call_operand.vmem [shape: s32[1,128], index: 1, kind: input, shape index: {}]
  %s2 = inlined_call_operand.vmem [shape: f32[128,128], index: 2, kind: input, shape index: {}]
  %s3 = inlined_call_operand.vmem [shape: f32[128,1], index: 3, kind: output, shape index: {}]
  %s4 = sld [smem:[#allocation0]]
  $region22: #{tpu_custom_call.1} parent=0
    _
  %s6 = ssub.s32 1, %s4
  %s7 = scalar_select 0, %s6, %s4
  // Predicated region
  $region2: #{tpu_custom_call.1} parent=0 // pred_check
    _
  $region3: #{tpu_custom_call.1} parent=0 // pred_check_branch
    %9 = sbr.rel (0) target = $region5
  $region4: #{tpu_custom_call.1} parent=0 // pred_region
    _
  $region5: #{tpu_custom_call.1} parent=0 // pred_fallthru
    _
  // Predicated region
  $region6: #{tpu_custom_call.1} parent=0 // pred_check
    _
  $region7: #{tpu_custom_call.1} parent=0 // pred_check_branch
    %11 = sbr.rel (0) target = $region9
  $region8: #{tpu_custom_call.1} parent=0 // pred_region
    _
  $region9: #{tpu_custom_call.1} parent=0 // pred_fallthru
    _
  // Predicated region
  $region10: #{tpu_custom_call.1} parent=0 // pred_check
    _
  $region11: #{tpu_custom_call.1} parent=0 // pred_check_branch
    %13 = sbr.rel (0) target = $region13
  $region12: #{tpu_custom_call.1} parent=0 // pred_region
    _
  $region13: #{tpu_custom_call.1} parent=0 // pred_fallthru
    _
  %s14 = smul.u32 0, 128
  %v15 = vld [vmem:[%s2] sm:$0xff]
  %v16 = vld [vmem:[%s2 + $0x8] sm:$0xff]
  %v17 = vld [vmem:[%s2 + $0x10] sm:$0xff]
  %v18 = vld [vmem:[%s2 + $0x18] sm:$0xff]
  %v19 = vld [vmem:[%s2 + $0x20] sm:$0xff]
  %v20 = vld [vmem:[%s2 + $0x28] sm:$0xff]
  %v21 = vld [vmem:[%s2 + $0x30] sm:$0xff]
  %v22 = vld [vmem:[%s2 + $0x38] sm:$0xff]
  %v23 = vld [vmem:[%s2 + $0x40] sm:$0xff]
  %v24 = vld [vmem:[%s2 + $0x48] sm:$0xff]
  %v25 = vld [vmem:[%s2 + $0x50] sm:$0xff]
  %v26 = vld [vmem:[%s2 + $0x58] sm:$0xff]
  %v27 = vld [vmem:[%s2 + $0x60] sm:$0xff]
  %v28 = vld [vmem:[%s2 + $0x68] sm:$0xff]
  %v29 = vld [vmem:[%s2 + $0x70] sm:$0xff]
  %v30 = vld [vmem:[%s2 + $0x78] sm:$0xff]
  %s31 = scalar_lea.vmem %s2, %s14
  %v32 = vld [vmem:[%s31] sm:$0xff]
  %v33 = vld [vmem:[%s31 + $0x8] sm:$0xff]
  %v34 = vld [vmem:[%s31 + $0x10] sm:$0xff]
  %v35 = vld [vmem:[%s31 + $0x18] sm:$0xff]
  %v36 = vld [vmem:[%s31 + $0x20] sm:$0xff]
  %v37 = vld [vmem:[%s31 + $0x28] sm:$0xff]
  %v38 = vld [vmem:[%s31 + $0x30] sm:$0xff]
  %v39 = vld [vmem:[%s31 + $0x38] sm:$0xff]
  %v40 = vld [vmem:[%s31 + $0x40] sm:$0xff]
  %v41 = vld [vmem:[%s31 + $0x48] sm:$0xff]
  %v42 = vld [vmem:[%s31 + $0x50] sm:$0xff]
  %v43 = vld [vmem:[%s31 + $0x58] sm:$0xff]
  %v44 = vld [vmem:[%s31 + $0x60] sm:$0xff]
  %v45 = vld [vmem:[%s31 + $0x68] sm:$0xff]
  %v46 = vld [vmem:[%s31 + $0x70] sm:$0xff]
  %v47 = vld [vmem:[%s31 + $0x78] sm:$0xff]
  %48 = vmatpush.xpose.msra.mxu0 %v30
  %49 = vmatpush.xpose.msra.mxu0 %v29
  %50 = vmatpush.xpose.msra.mxu0 %v28
  %51 = vmatpush.xpose.msra.mxu0 %v27
  %52 = vmatpush.xpose.msra.mxu0 %v26
  %53 = vmatpush.xpose.msra.mxu0 %v25
  %54 = vmatpush.xpose.msra.mxu0 %v24
  %55 = vmatpush.xpose.msra.mxu0 %v23
  %56 = vmatpush.xpose.msra.mxu0 %v22
  %57 = vmatpush.xpose.msra.mxu0 %v21
  %58 = vmatpush.xpose.msra.mxu0 %v20
  %59 = vmatpush.xpose.msra.mxu0 %v19
  %60 = vmatpush.xpose.msra.mxu0 %v18
  %61 = vmatpush.xpose.msra.mxu0 %v17
  %62 = vmatpush.xpose.msra.mxu0 %v16
  %63 = vmatpush.xpose.msra.mxu0 %v15
  %64 = vmatmul.f32.gmra.mxu0 %v32
  %v65 = vpop.f32.mrf.mxu0
  %v66 = vadd.f32 0.0, %v65
  %67 = vmatmul.f32.gmra.mxu0 %v33
  %v68 = vpop.f32.mrf.mxu0
  %v69 = vadd.f32 0.0, %v68
  %70 = vmatmul.f32.gmra.mxu0 %v34
  %v71 = vpop.f32.mrf.mxu0
  %v72 = vadd.f32 0.0, %v71
  %73 = vmatmul.f32.gmra.mxu0 %v35
  %v74 = vpop.f32.mrf.mxu0
  %v75 = vadd.f32 0.0, %v74
  %76 = vmatmul.f32.gmra.mxu0 %v36
  %v77 = vpop.f32.mrf.mxu0
  %v78 = vadd.f32 0.0, %v77
  %79 = vmatmul.f32.gmra.mxu0 %v37
  %v80 = vpop.f32.mrf.mxu0
  %v81 = vadd.f32 0.0, %v80
  %82 = vmatmul.f32.gmra.mxu0 %v38
  %v83 = vpop.f32.mrf.mxu0
  %v84 = vadd.f32 0.0, %v83
  %85 = vmatmul.f32.gmra.mxu0 %v39
  %v86 = vpop.f32.mrf.mxu0
  %v87 = vadd.f32 0.0, %v86
  %88 = vmatmul.f32.gmra.mxu0 %v40
  %v89 = vpop.f32.mrf.mxu0
  %v90 = vadd.f32 0.0, %v89
  %91 = vmatmul.f32.gmra.mxu0 %v41
  %v92 = vpop.f32.mrf.mxu0
  %v93 = vadd.f32 0.0, %v92
  %94 = vmatmul.f32.gmra.mxu0 %v42
  %v95 = vpop.f32.mrf.mxu0
  %v96 = vadd.f32 0.0, %v95
  %97 = vmatmul.f32.gmra.mxu0 %v43
  %v98 = vpop.f32.mrf.mxu0
  %v99 = vadd.f32 0.0, %v98
  %100 = vmatmul.f32.gmra.mxu0 %v44
  %v101 = vpop.f32.mrf.mxu0
  %v102 = vadd.f32 0.0, %v101
  %103 = vmatmul.f32.gmra.mxu0 %v45
  %v104 = vpop.f32.mrf.mxu0
  %v105 = vadd.f32 0.0, %v104
  %106 = vmatmul.f32.gmra.mxu0 %v46
  %v107 = vpop.f32.mrf.mxu0
  %v108 = vadd.f32 0.0, %v107
  %109 = vmatmul.f32.gmra.mxu0 %v47
  %v110 = vpop.f32.mrf.mxu0
  %v111 = vadd.f32 0.0, %v110
  %112 = vdwg.mxu0
  %v113 = vmul.f32 %v66, 14.285714
  %v114 = vmul.f32 %v69, 14.285714
  %v115 = vmul.f32 %v72, 14.285714
  %v116 = vmul.f32 %v75, 14.285714
  %v117 = vmul.f32 %v78, 14.285714
  %v118 = vmul.f32 %v81, 14.285714
  %v119 = vmul.f32 %v84, 14.285714
  %v120 = vmul.f32 %v87, 14.285714
  %v121 = vmul.f32 %v90, 14.285714
  %v122 = vmul.f32 %v93, 14.285714
  %v123 = vmul.f32 %v96, 14.285714
  %v124 = vmul.f32 %v99, 14.285714
  %v125 = vmul.f32 %v102, 14.285714
  %v126 = vmul.f32 %v105, 14.285714
  %v127 = vmul.f32 %v108, 14.285714
  %v128 = vmul.f32 %v111, 14.285714
  %v129 = vlaneseq
  %v130 = vand.u32 %v129, 127
  %v131 = vlaneseq
  %v132 = vshrl.u32 %v131, 7
  %v133 = vadd.s32 %v132, 8
  %v134 = vadd.s32 %v132, 16
  %v135 = vadd.s32 %v132, 24
  %v136 = vadd.s32 %v132, 32
  %v137 = vadd.s32 %v132, 40
  %v138 = vadd.s32 %v132, 48
  %v139 = vadd.s32 %v132, 56
  %v140 = vadd.s32 %v132, 64
  %v141 = vadd.s32 %v132, 72
  %v142 = vadd.s32 %v132, 80
  %v143 = vadd.s32 %v132, 88
  %v144 = vadd.s32 %v132, 96
  %v145 = vadd.s32 %v132, 104
  %v146 = vadd.s32 %v132, 112
  %v147 = vadd.s32 %v132, 120
  %v148 = vstv %s14
  %v149 = vadd.s32 %v132, %v148
  %v150 = vadd.s32 %v133, %v148
  %v151 = vadd.s32 %v134, %v148
  %v152 = vadd.s32 %v135, %v148
  %v153 = vadd.s32 %v136, %v148
  %v154 = vadd.s32 %v137, %v148
  %v155 = vadd.s32 %v138, %v148
  %v156 = vadd.s32 %v139, %v148
  %v157 = vadd.s32 %v140, %v148
  %v158 = vadd.s32 %v141, %v148
  %v159 = vadd.s32 %v142, %v148
  %v160 = vadd.s32 %v143, %v148
  %v161 = vadd.s32 %v144, %v148
  %v162 = vadd.s32 %v145, %v148
  %v163 = vadd.s32 %v146, %v148
  %v164 = vadd.s32 %v147, %v148
  %vm165 = vcmp.lt.s32.totalorder %v130, 16
  %v166 = vsel %vm165, %v113, -1e+30
  %v167 = vsel %vm165, %v114, -1e+30
  %v168 = vsel %vm165, %v115, -1e+30
  %v169 = vsel %vm165, %v116, -1e+30
  %v170 = vsel %vm165, %v117, -1e+30
  %v171 = vsel %vm165, %v118, -1e+30
  %v172 = vsel %vm165, %v119, -1e+30
  %v173 = vsel %vm165, %v120, -1e+30
  %v174 = vsel %vm165, %v121, -1e+30
  %v175 = vsel %vm165, %v122, -1e+30
  %v176 = vsel %vm165, %v123, -1e+30
  %v177 = vsel %vm165, %v124, -1e+30
  %v178 = vsel %vm165, %v125, -1e+30
  %v179 = vsel %vm165, %v126, -1e+30
  %v180 = vsel %vm165, %v127, -1e+30
  %v181 = vsel %vm165, %v128, -1e+30
  %182 = vmax.xlane.f32.xlu0 %v166
  %v183 = vpop.xlane.xlu0 %182
  %184 = vmax.xlane.f32.xlu0 %v167
  %v185 = vpop.xlane.xlu0 %184
  %186 = vmax.xlane.f32.xlu0 %v168
  %v187 = vpop.xlane.xlu0 %186
  %188 = vmax.xlane.f32.xlu0 %v169
  %v189 = vpop.xlane.xlu0 %188
  %190 = vmax.xlane.f32.xlu0 %v170
  %v191 = vpop.xlane.xlu0 %190
  %192 = vmax.xlane.f32.xlu0 %v171
  %v193 = vpop.xlane.xlu0 %192
  %194 = vmax.xlane.f32.xlu0 %v172
  %v195 = vpop.xlane.xlu0 %194
  %196 = vmax.xlane.f32.xlu0 %v173
  %v197 = vpop.xlane.xlu0 %196
  %198 = vmax.xlane.f32.xlu0 %v174
  %v199 = vpop.xlane.xlu0 %198
  %200 = vmax.xlane.f32.xlu0 %v175
  %v201 = vpop.xlane.xlu0 %200
  %202 = vmax.xlane.f32.xlu0 %v176
  %v203 = vpop.xlane.xlu0 %202
  %204 = vmax.xlane.f32.xlu0 %v177
  %v205 = vpop.xlane.xlu0 %204
  %206 = vmax.xlane.f32.xlu0 %v178
  %v207 = vpop.xlane.xlu0 %206
  %208 = vmax.xlane.f32.xlu0 %v179
  %v209 = vpop.xlane.xlu0 %208
  %210 = vmax.xlane.f32.xlu0 %v180
  %v211 = vpop.xlane.xlu0 %210
  %212 = vmax.xlane.f32.xlu0 %v181
  %v213 = vpop.xlane.xlu0 %212
  %v214 = vsub.f32 %v166, %v183
  %v215 = vsub.f32 %v167, %v185
  %v216 = vsub.f32 %v168, %v187
  %v217 = vsub.f32 %v169, %v189
  %v218 = vsub.f32 %v170, %v191
  %v219 = vsub.f32 %v171, %v193
  %v220 = vsub.f32 %v172, %v195
  %v221 = vsub.f32 %v173, %v197
  %v222 = vsub.f32 %v174, %v199
  %v223 = vsub.f32 %v175, %v201
  %v224 = vsub.f32 %v176, %v203
  %v225 = vsub.f32 %v177, %v205
  %v226 = vsub.f32 %v178, %v207
  %v227 = vsub.f32 %v179, %v209
  %v228 = vsub.f32 %v180, %v211
  %v229 = vsub.f32 %v181, %v213
  %vm230 = vcmp.ne.s32.totalorder %v149, %v130
  %vm231 = vcmp.ne.s32.totalorder %v150, %v130
  %vm232 = vcmp.ne.s32.totalorder %v151, %v130
  %vm233 = vcmp.ne.s32.totalorder %v152, %v130
  %vm234 = vcmp.ne.s32.totalorder %v153, %v130
  %vm235 = vcmp.ne.s32.totalorder %v154, %v130
  %vm236 = vcmp.ne.s32.totalorder %v155, %v130
  %vm237 = vcmp.ne.s32.totalorder %v156, %v130
  %vm238 = vcmp.ne.s32.totalorder %v157, %v130
  %vm239 = vcmp.ne.s32.totalorder %v158, %v130
  %vm240 = vcmp.ne.s32.totalorder %v159, %v130
  %vm241 = vcmp.ne.s32.totalorder %v160, %v130
  %vm242 = vcmp.ne.s32.totalorder %v161, %v130
  %vm243 = vcmp.ne.s32.totalorder %v162, %v130
  %vm244 = vcmp.ne.s32.totalorder %v163, %v130
  %vm245 = vcmp.ne.s32.totalorder %v164, %v130
  %vm246 = vmand %vm165, %vm230
  %vm247 = vmand %vm165, %vm231
  %vm248 = vmand %vm165, %vm232
  %vm249 = vmand %vm165, %vm233
  %vm250 = vmand %vm165, %vm234
  %vm251 = vmand %vm165, %vm235
  %vm252 = vmand %vm165, %vm236
  %vm253 = vmand %vm165, %vm237
  %vm254 = vmand %vm165, %vm238
  %vm255 = vmand %vm165, %vm239
  %vm256 = vmand %vm165, %vm240
  %vm257 = vmand %vm165, %vm241
  %vm258 = vmand %vm165, %vm242
  %vm259 = vmand %vm165, %vm243
  %vm260 = vmand %vm165, %vm244
  %vm261 = vmand %vm165, %vm245
  %v262 = vsel %vm246, 1.0, 0.0
  %v263 = vsel %vm247, 1.0, 0.0
  %v264 = vsel %vm248, 1.0, 0.0
  %v265 = vsel %vm249, 1.0, 0.0
  %v266 = vsel %vm250, 1.0, 0.0
  %v267 = vsel %vm251, 1.0, 0.0
  %v268 = vsel %vm252, 1.0, 0.0
  %v269 = vsel %vm253, 1.0, 0.0
  %v270 = vsel %vm254, 1.0, 0.0
  %v271 = vsel %vm255, 1.0, 0.0
  %v272 = vsel %vm256, 1.0, 0.0
  %v273 = vsel %vm257, 1.0, 0.0
  %v274 = vsel %vm258, 1.0, 0.0
  %v275 = vsel %vm259, 1.0, 0.0
  %v276 = vsel %vm260, 1.0, 0.0
  %v277 = vsel %vm261, 1.0, 0.0
  %v278 = vld [vmem:[%s0] sm:$0xff]
  %v279 = vld [vmem:[%s0 + $0x8] sm:$0xff]
  %v280 = vld [vmem:[%s0 + $0x10] sm:$0xff]
  %v281 = vld [vmem:[%s0 + $0x18] sm:$0xff]
  %v282 = vld [vmem:[%s0 + $0x20] sm:$0xff]
  %v283 = vld [vmem:[%s0 + $0x28] sm:$0xff]
  %v284 = vld [vmem:[%s0 + $0x30] sm:$0xff]
  %v285 = vld [vmem:[%s0 + $0x38] sm:$0xff]
  %v286 = vld [vmem:[%s0 + $0x40] sm:$0xff]
  %v287 = vld [vmem:[%s0 + $0x48] sm:$0xff]
  %v288 = vld [vmem:[%s0 + $0x50] sm:$0xff]
  %v289 = vld [vmem:[%s0 + $0x58] sm:$0xff]
  %v290 = vld [vmem:[%s0 + $0x60] sm:$0xff]
  %v291 = vld [vmem:[%s0 + $0x68] sm:$0xff]
  %v292 = vld [vmem:[%s0 + $0x70] sm:$0xff]
  %v293 = vld [vmem:[%s0 + $0x78] sm:$0xff]
  %v294 = vld [vmem:[%s1] sm:$0x1]
  %295 = vset.pattern.permute.xlu0 0
  %296 = vperm.xlu0 %295, %v278
  %v297 = vpop.permute.xlu0 %296
  %298 = vset.pattern.permute.xlu0 0
  %299 = vperm.xlu0 %298, %v279
  %v300 = vpop.permute.xlu0 %299
  %301 = vset.pattern.permute.xlu0 0
  %302 = vperm.xlu0 %301, %v280
  %v303 = vpop.permute.xlu0 %302
  %304 = vset.pattern.permute.xlu0 0
  %305 = vperm.xlu0 %304, %v281
  %v306 = vpop.permute.xlu0 %305
  %307 = vset.pattern.permute.xlu0 0
  %308 = vperm.xlu0 %307, %v282
  %v309 = vpop.permute.xlu0 %308
  %310 = vset.pattern.permute.xlu0 0
  %311 = vperm.xlu0 %310, %v283
  %v312 = vpop.permute.xlu0 %311
  %313 = vset.pattern.permute.xlu0 0
  %314 = vperm.xlu0 %313, %v284
  %v315 = vpop.permute.xlu0 %314
  %316 = vset.pattern.permute.xlu0 0
  %317 = vperm.xlu0 %316, %v285
  %v318 = vpop.permute.xlu0 %317
  %319 = vset.pattern.permute.xlu0 0
  %320 = vperm.xlu0 %319, %v286
  %v321 = vpop.permute.xlu0 %320
  %322 = vset.pattern.permute.xlu0 0
  %323 = vperm.xlu0 %322, %v287
  %v324 = vpop.permute.xlu0 %323
  %325 = vset.pattern.permute.xlu0 0
  %326 = vperm.xlu0 %325, %v288
  %v327 = vpop.permute.xlu0 %326
  %328 = vset.pattern.permute.xlu0 0
  %329 = vperm.xlu0 %328, %v289
  %v330 = vpop.permute.xlu0 %329
  %331 = vset.pattern.permute.xlu0 0
  %332 = vperm.xlu0 %331, %v290
  %v333 = vpop.permute.xlu0 %332
  %334 = vset.pattern.permute.xlu0 0
  %335 = vperm.xlu0 %334, %v291
  %v336 = vpop.permute.xlu0 %335
  %337 = vset.pattern.permute.xlu0 0
  %338 = vperm.xlu0 %337, %v292
  %v339 = vpop.permute.xlu0 %338
  %340 = vset.pattern.permute.xlu0 0
  %341 = vperm.xlu0 %340, %v293
  %v342 = vpop.permute.xlu0 %341
  %v343 = vperm.slane %v294, 0
  %vm344 = vcmp.eq.s32.totalorder %v297, %v343
  %vm345 = vcmp.eq.s32.totalorder %v300, %v343
  %vm346 = vcmp.eq.s32.totalorder %v303, %v343
  %vm347 = vcmp.eq.s32.totalorder %v306, %v343
  %vm348 = vcmp.eq.s32.totalorder %v309, %v343
  %vm349 = vcmp.eq.s32.totalorder %v312, %v343
  %vm350 = vcmp.eq.s32.totalorder %v315, %v343
  %vm351 = vcmp.eq.s32.totalorder %v318, %v343
  %vm352 = vcmp.eq.s32.totalorder %v321, %v343
  %vm353 = vcmp.eq.s32.totalorder %v324, %v343
  %vm354 = vcmp.eq.s32.totalorder %v327, %v343
  %vm355 = vcmp.eq.s32.totalorder %v330, %v343
  %vm356 = vcmp.eq.s32.totalorder %v333, %v343
  %vm357 = vcmp.eq.s32.totalorder %v336, %v343
  %vm358 = vcmp.eq.s32.totalorder %v339, %v343
  %vm359 = vcmp.eq.s32.totalorder %v342, %v343
  %v360 = vsel %vm344, 1, 0
  %v361 = vsel %vm345, 1, 0
  %v362 = vsel %vm346, 1, 0
  %v363 = vsel %vm347, 1, 0
  %v364 = vsel %vm348, 1, 0
  %v365 = vsel %vm349, 1, 0
  %v366 = vsel %vm350, 1, 0
  %v367 = vsel %vm351, 1, 0
  %v368 = vsel %vm352, 1, 0
  %v369 = vsel %vm353, 1, 0
  %v370 = vsel %vm354, 1, 0
  %v371 = vsel %vm355, 1, 0
  %v372 = vsel %vm356, 1, 0
  %v373 = vsel %vm357, 1, 0
  %v374 = vsel %vm358, 1, 0
  %v375 = vsel %vm359, 1, 0
  %v376 = vcvt.s32.f32 %v360
  %v377 = vcvt.s32.f32 %v361
  %v378 = vcvt.s32.f32 %v362
  %v379 = vcvt.s32.f32 %v363
  %v380 = vcvt.s32.f32 %v364
  %v381 = vcvt.s32.f32 %v365
  %v382 = vcvt.s32.f32 %v366
  %v383 = vcvt.s32.f32 %v367
  %v384 = vcvt.s32.f32 %v368
  %v385 = vcvt.s32.f32 %v369
  %v386 = vcvt.s32.f32 %v370
  %v387 = vcvt.s32.f32 %v371
  %v388 = vcvt.s32.f32 %v372
  %v389 = vcvt.s32.f32 %v373
  %v390 = vcvt.s32.f32 %v374
  %v391 = vcvt.s32.f32 %v375
  %v392 = vmul.f32 %v376, %v262
  %v393 = vmul.f32 %v377, %v263
  %v394 = vmul.f32 %v378, %v264
  %v395 = vmul.f32 %v379, %v265
  %v396 = vmul.f32 %v380, %v266
  %v397 = vmul.f32 %v381, %v267
  %v398 = vmul.f32 %v382, %v268
  %v399 = vmul.f32 %v383, %v269
  %v400 = vmul.f32 %v384, %v270
  %v401 = vmul.f32 %v385, %v271
  %v402 = vmul.f32 %v386, %v272
  %v403 = vmul.f32 %v387, %v273
  %v404 = vmul.f32 %v388, %v274
  %v405 = vmul.f32 %v389, %v275
  %v406 = vmul.f32 %v390, %v276
  %v407 = vmul.f32 %v391, %v277
  %v408 = vmul.f32 %v214, 1.442695
  %v409 = vpow.pop %v408
  %v410 = vmul.f32 %v215, 1.442695
  %v411 = vpow.pop %v410
  %v412 = vmul.f32 %v216, 1.442695
  %v413 = vpow.pop %v412
  %v414 = vmul.f32 %v217, 1.442695
  %v415 = vpow.pop %v414
  %v416 = vmul.f32 %v218, 1.442695
  %v417 = vpow.pop %v416
  %v418 = vmul.f32 %v219, 1.442695
  %v419 = vpow.pop %v418
  %v420 = vmul.f32 %v220, 1.442695
  %v421 = vpow.pop %v420
  %v422 = vmul.f32 %v221, 1.442695
  %v423 = vpow.pop %v422
  %v424 = vmul.f32 %v222, 1.442695
  %v425 = vpow.pop %v424
  %v426 = vmul.f32 %v223, 1.442695
  %v427 = vpow.pop %v426
  %v428 = vmul.f32 %v224, 1.442695
  %v429 = vpow.pop %v428
  %v430 = vmul.f32 %v225, 1.442695
  %v431 = vpow.pop %v430
  %v432 = vmul.f32 %v226, 1.442695
  %v433 = vpow.pop %v432
  %v434 = vmul.f32 %v227, 1.442695
  %v435 = vpow.pop %v434
  %v436 = vmul.f32 %v228, 1.442695
  %v437 = vpow.pop %v436
  %v438 = vmul.f32 %v229, 1.442695
  %v439 = vpow.pop %v438
  %v440 = vmul.f32 %v409, %v262
  %v441 = vmul.f32 %v411, %v263
  %v442 = vmul.f32 %v413, %v264
  %v443 = vmul.f32 %v415, %v265
  %v444 = vmul.f32 %v417, %v266
  %v445 = vmul.f32 %v419, %v267
  %v446 = vmul.f32 %v421, %v268
  %v447 = vmul.f32 %v423, %v269
  %v448 = vmul.f32 %v425, %v270
  %v449 = vmul.f32 %v427, %v271
  %v450 = vmul.f32 %v429, %v272
  %v451 = vmul.f32 %v431, %v273
  %v452 = vmul.f32 %v433, %v274
  %v453 = vmul.f32 %v435, %v275
  %v454 = vmul.f32 %v437, %v276
  %v455 = vmul.f32 %v439, %v277
  %456 = vadd.xlane.f32.xlu0 %v440
  %v457 = vpop.xlane.xlu0 %456
  %458 = vadd.xlane.f32.xlu0 %v441
  %v459 = vpop.xlane.xlu0 %458
  %460 = vadd.xlane.f32.xlu0 %v442
  %v461 = vpop.xlane.xlu0 %460
  %462 = vadd.xlane.f32.xlu0 %v443
  %v463 = vpop.xlane.xlu0 %462
  %464 = vadd.xlane.f32.xlu0 %v444
  %v465 = vpop.xlane.xlu0 %464
  %466 = vadd.xlane.f32.xlu0 %v445
  %v467 = vpop.xlane.xlu0 %466
  %468 = vadd.xlane.f32.xlu0 %v446
  %v469 = vpop.xlane.xlu0 %468
  %470 = vadd.xlane.f32.xlu0 %v447
  %v471 = vpop.xlane.xlu0 %470
  %472 = vadd.xlane.f32.xlu0 %v448
  %v473 = vpop.xlane.xlu0 %472
  %474 = vadd.xlane.f32.xlu0 %v449
  %v475 = vpop.xlane.xlu0 %474
  %476 = vadd.xlane.f32.xlu0 %v450
  %v477 = vpop.xlane.xlu0 %476
  %478 = vadd.xlane.f32.xlu0 %v451
  %v479 = vpop.xlane.xlu0 %478
  %480 = vadd.xlane.f32.xlu0 %v452
  %v481 = vpop.xlane.xlu0 %480
  %482 = vadd.xlane.f32.xlu0 %v453
  %v483 = vpop.xlane.xlu0 %482
  %484 = vadd.xlane.f32.xlu0 %v454
  %v485 = vpop.xlane.xlu0 %484
  %486 = vadd.xlane.f32.xlu0 %v455
  %v487 = vpop.xlane.xlu0 %486
  %v488 = vlog2.pop %v457
  %v489 = vmul.f32 %v488, 0.6931472
  %v490 = vlog2.pop %v459
  %v491 = vmul.f32 %v490, 0.6931472
  %v492 = vlog2.pop %v461
  %v493 = vmul.f32 %v492, 0.6931472
  %v494 = vlog2.pop %v463
  %v495 = vmul.f32 %v494, 0.6931472
  %v496 = vlog2.pop %v465
  %v497 = vmul.f32 %v496, 0.6931472
  %v498 = vlog2.pop %v467
  %v499 = vmul.f32 %v498, 0.6931472
  %v500 = vlog2.pop %v469
  %v501 = vmul.f32 %v500, 0.6931472
  %v502 = vlog2.pop %v471
  %v503 = vmul.f32 %v502, 0.6931472
  %v504 = vlog2.pop %v473
  %v505 = vmul.f32 %v504, 0.6931472
  %v506 = vlog2.pop %v475
  %v507 = vmul.f32 %v506, 0.6931472
  %v508 = vlog2.pop %v477
  %v509 = vmul.f32 %v508, 0.6931472
  %v510 = vlog2.pop %v479
  %v511 = vmul.f32 %v510, 0.6931472
  %v512 = vlog2.pop %v481
  %v513 = vmul.f32 %v512, 0.6931472
  %v514 = vlog2.pop %v483
  %v515 = vmul.f32 %v514, 0.6931472
  %v516 = vlog2.pop %v485
  %v517 = vmul.f32 %v516, 0.6931472
  %v518 = vlog2.pop %v487
  %v519 = vmul.f32 %v518, 0.6931472
  %520 = vadd.xlane.f32.xlu0 %v392
  %v521 = vpop.xlane.xlu0 %520
  %522 = vadd.xlane.f32.xlu0 %v393
  %v523 = vpop.xlane.xlu0 %522
  %524 = vadd.xlane.f32.xlu0 %v394
  %v525 = vpop.xlane.xlu0 %524
  %526 = vadd.xlane.f32.xlu0 %v395
  %v527 = vpop.xlane.xlu0 %526
  %528 = vadd.xlane.f32.xlu0 %v396
  %v529 = vpop.xlane.xlu0 %528
  %530 = vadd.xlane.f32.xlu0 %v397
  %v531 = vpop.xlane.xlu0 %530
  %532 = vadd.xlane.f32.xlu0 %v398
  %v533 = vpop.xlane.xlu0 %532
  %534 = vadd.xlane.f32.xlu0 %v399
  %v535 = vpop.xlane.xlu0 %534
  %536 = vadd.xlane.f32.xlu0 %v400
  %v537 = vpop.xlane.xlu0 %536
  %538 = vadd.xlane.f32.xlu0 %v401
  %v539 = vpop.xlane.xlu0 %538
  %540 = vadd.xlane.f32.xlu0 %v402
  %v541 = vpop.xlane.xlu0 %540
  %542 = vadd.xlane.f32.xlu0 %v403
  %v543 = vpop.xlane.xlu0 %542
  %544 = vadd.xlane.f32.xlu0 %v404
  %v545 = vpop.xlane.xlu0 %544
  %546 = vadd.xlane.f32.xlu0 %v405
  %v547 = vpop.xlane.xlu0 %546
  %548 = vadd.xlane.f32.xlu0 %v406
  %v549 = vpop.xlane.xlu0 %548
  %550 = vadd.xlane.f32.xlu0 %v407
  %v551 = vpop.xlane.xlu0 %550
  %v552 = vmul.f32 %v392, %v214
  %v553 = vmul.f32 %v393, %v215
  %v554 = vmul.f32 %v394, %v216
  %v555 = vmul.f32 %v395, %v217
  %v556 = vmul.f32 %v396, %v218
  %v557 = vmul.f32 %v397, %v219
  %v558 = vmul.f32 %v398, %v220
  %v559 = vmul.f32 %v399, %v221
  %v560 = vmul.f32 %v400, %v222
  %v561 = vmul.f32 %v401, %v223
  %v562 = vmul.f32 %v402, %v224
  %v563 = vmul.f32 %v403, %v225
  %v564 = vmul.f32 %v404, %v226
  %v565 = vmul.f32 %v405, %v227
  %v566 = vmul.f32 %v406, %v228
  %v567 = vmul.f32 %v407, %v229
  %568 = vadd.xlane.f32.xlu0 %v552
  %v569 = vpop.xlane.xlu0 %568
  %570 = vadd.xlane.f32.xlu0 %v553
  %v571 = vpop.xlane.xlu0 %570
  %572 = vadd.xlane.f32.xlu0 %v554
  %v573 = vpop.xlane.xlu0 %572
  %574 = vadd.xlane.f32.xlu0 %v555
  %v575 = vpop.xlane.xlu0 %574
  %576 = vadd.xlane.f32.xlu0 %v556
  %v577 = vpop.xlane.xlu0 %576
  %578 = vadd.xlane.f32.xlu0 %v557
  %v579 = vpop.xlane.xlu0 %578
  %580 = vadd.xlane.f32.xlu0 %v558
  %v581 = vpop.xlane.xlu0 %580
  %582 = vadd.xlane.f32.xlu0 %v559
  %v583 = vpop.xlane.xlu0 %582
  %584 = vadd.xlane.f32.xlu0 %v560
  %v585 = vpop.xlane.xlu0 %584
  %586 = vadd.xlane.f32.xlu0 %v561
  %v587 = vpop.xlane.xlu0 %586
  %588 = vadd.xlane.f32.xlu0 %v562
  %v589 = vpop.xlane.xlu0 %588
  %590 = vadd.xlane.f32.xlu0 %v563
  %v591 = vpop.xlane.xlu0 %590
  %592 = vadd.xlane.f32.xlu0 %v564
  %v593 = vpop.xlane.xlu0 %592
  %594 = vadd.xlane.f32.xlu0 %v565
  %v595 = vpop.xlane.xlu0 %594
  %596 = vadd.xlane.f32.xlu0 %v566
  %v597 = vpop.xlane.xlu0 %596
  %598 = vadd.xlane.f32.xlu0 %v567
  %v599 = vpop.xlane.xlu0 %598
  %v600 = vmul.f32 %v521, %v489
  %v601 = vmul.f32 %v523, %v491
  %v602 = vmul.f32 %v525, %v493
  %v603 = vmul.f32 %v527, %v495
  %v604 = vmul.f32 %v529, %v497
  %v605 = vmul.f32 %v531, %v499
  %v606 = vmul.f32 %v533, %v501
  %v607 = vmul.f32 %v535, %v503
  %v608 = vmul.f32 %v537, %v505
  %v609 = vmul.f32 %v539, %v507
  %v610 = vmul.f32 %v541, %v509
  %v611 = vmul.f32 %v543, %v511
  %v612 = vmul.f32 %v545, %v513
  %v613 = vmul.f32 %v547, %v515
  %v614 = vmul.f32 %v549, %v517
  %v615 = vmul.f32 %v551, %v519
  %v616 = vsub.f32 %v569, %v600
  %v617 = vsub.f32 %v571, %v601
  %v618 = vsub.f32 %v573, %v602
  %v619 = vsub.f32 %v575, %v603
  %v620 = vsub.f32 %v577, %v604
  %v621 = vsub.f32 %v579, %v605
  %v622 = vsub.f32 %v581, %v606
  %v623 = vsub.f32 %v583, %v607
  %v624 = vsub.f32 %v585, %v608
  %v625 = vsub.f32 %v587, %v609
  %v626 = vsub.f32 %v589, %v610
  %v627 = vsub.f32 %v591, %v611
  %v628 = vsub.f32 %v593, %v612
  %v629 = vsub.f32 %v595, %v613
  %v630 = vsub.f32 %v597, %v614
  %v631 = vsub.f32 %v599, %v615
  %v632 = vrcp.pop %v521
  %v633 = vmul.f32 %v521, %v632
  %v634 = vsub.f32 1.0, %v633
  %v635 = vmul.f32 %v632, %v634
  %v636 = vadd.f32 %v632, %v635
  %vm637 = vweird.f32 %v521
  %vm638 = vweird.f32 %v632
  %vm639 = vmor %vm637, %vm638
  %v640 = vsel %vm639, %v632, %v636
  %v641 = vand.u32 2147483647, %v521
  %vm642 = vcmp.eq.f32.partialorder %v641, 8.507059e+37
  %v643 = vand.u32 %v521, 2147483648
  %v644 = vor.u32 1.1754944e-38, %v643
  %v645 = vsel %vm642, %v644, %v640
  %v646 = vmul.f32 %v616, %v645
  %v647 = vrcp.pop %v523
  %v648 = vmul.f32 %v523, %v647
  %v649 = vsub.f32 1.0, %v648
  %v650 = vmul.f32 %v647, %v649
  %v651 = vadd.f32 %v647, %v650
  %vm652 = vweird.f32 %v523
  %vm653 = vweird.f32 %v647
  %vm654 = vmor %vm652, %vm653
  %v655 = vsel %vm654, %v647, %v651
  %v656 = vand.u32 2147483647, %v523
  %vm657 = vcmp.eq.f32.partialorder %v656, 8.507059e+37
  %v658 = vand.u32 %v523, 2147483648
  %v659 = vor.u32 1.1754944e-38, %v658
  %v660 = vsel %vm657, %v659, %v655
  %v661 = vmul.f32 %v617, %v660
  %v662 = vrcp.pop %v525
  %v663 = vmul.f32 %v525, %v662
  %v664 = vsub.f32 1.0, %v663
  %v665 = vmul.f32 %v662, %v664
  %v666 = vadd.f32 %v662, %v665
  %vm667 = vweird.f32 %v525
  %vm668 = vweird.f32 %v662
  %vm669 = vmor %vm667, %vm668
  %v670 = vsel %vm669, %v662, %v666
  %v671 = vand.u32 2147483647, %v525
  %vm672 = vcmp.eq.f32.partialorder %v671, 8.507059e+37
  %v673 = vand.u32 %v525, 2147483648
  %v674 = vor.u32 1.1754944e-38, %v673
  %v675 = vsel %vm672, %v674, %v670
  %v676 = vmul.f32 %v618, %v675
  %v677 = vrcp.pop %v527
  %v678 = vmul.f32 %v527, %v677
  %v679 = vsub.f32 1.0, %v678
  %v680 = vmul.f32 %v677, %v679
  %v681 = vadd.f32 %v677, %v680
  %vm682 = vweird.f32 %v527
  %vm683 = vweird.f32 %v677
  %vm684 = vmor %vm682, %vm683
  %v685 = vsel %vm684, %v677, %v681
  %v686 = vand.u32 2147483647, %v527
  %vm687 = vcmp.eq.f32.partialorder %v686, 8.507059e+37
  %v688 = vand.u32 %v527, 2147483648
  %v689 = vor.u32 1.1754944e-38, %v688
  %v690 = vsel %vm687, %v689, %v685
  %v691 = vmul.f32 %v619, %v690
  %v692 = vrcp.pop %v529
  %v693 = vmul.f32 %v529, %v692
  %v694 = vsub.f32 1.0, %v693
  %v695 = vmul.f32 %v692, %v694
  %v696 = vadd.f32 %v692, %v695
  %vm697 = vweird.f32 %v529
  %vm698 = vweird.f32 %v692
  %vm699 = vmor %vm697, %vm698
  %v700 = vsel %vm699, %v692, %v696
  %v701 = vand.u32 2147483647, %v529
  %vm702 = vcmp.eq.f32.partialorder %v701, 8.507059e+37
  %v703 = vand.u32 %v529, 2147483648
  %v704 = vor.u32 1.1754944e-38, %v703
  %v705 = vsel %vm702, %v704, %v700
  %v706 = vmul.f32 %v620, %v705
  %v707 = vrcp.pop %v531
  %v708 = vmul.f32 %v531, %v707
  %v709 = vsub.f32 1.0, %v708
  %v710 = vmul.f32 %v707, %v709
  %v711 = vadd.f32 %v707, %v710
  %vm712 = vweird.f32 %v531
  %vm713 = vweird.f32 %v707
  %vm714 = vmor %vm712, %vm713
  %v715 = vsel %vm714, %v707, %v711
  %v716 = vand.u32 2147483647, %v531
  %vm717 = vcmp.eq.f32.partialorder %v716, 8.507059e+37
  %v718 = vand.u32 %v531, 2147483648
  %v719 = vor.u32 1.1754944e-38, %v718
  %v720 = vsel %vm717, %v719, %v715
  %v721 = vmul.f32 %v621, %v720
  %v722 = vrcp.pop %v533
  %v723 = vmul.f32 %v533, %v722
  %v724 = vsub.f32 1.0, %v723
  %v725 = vmul.f32 %v722, %v724
  %v726 = vadd.f32 %v722, %v725
  %vm727 = vweird.f32 %v533
  %vm728 = vweird.f32 %v722
  %vm729 = vmor %vm727, %vm728
  %v730 = vsel %vm729, %v722, %v726
  %v731 = vand.u32 2147483647, %v533
  %vm732 = vcmp.eq.f32.partialorder %v731, 8.507059e+37
  %v733 = vand.u32 %v533, 2147483648
  %v734 = vor.u32 1.1754944e-38, %v733
  %v735 = vsel %vm732, %v734, %v730
  %v736 = vmul.f32 %v622, %v735
  %v737 = vrcp.pop %v535
  %v738 = vmul.f32 %v535, %v737
  %v739 = vsub.f32 1.0, %v738
  %v740 = vmul.f32 %v737, %v739
  %v741 = vadd.f32 %v737, %v740
  %vm742 = vweird.f32 %v535
  %vm743 = vweird.f32 %v737
  %vm744 = vmor %vm742, %vm743
  %v745 = vsel %vm744, %v737, %v741
  %v746 = vand.u32 2147483647, %v535
  %vm747 = vcmp.eq.f32.partialorder %v746, 8.507059e+37
  %v748 = vand.u32 %v535, 2147483648
  %v749 = vor.u32 1.1754944e-38, %v748
  %v750 = vsel %vm747, %v749, %v745
  %v751 = vmul.f32 %v623, %v750
  %v752 = vrcp.pop %v537
  %v753 = vmul.f32 %v537, %v752
  %v754 = vsub.f32 1.0, %v753
  %v755 = vmul.f32 %v752, %v754
  %v756 = vadd.f32 %v752, %v755
  %vm757 = vweird.f32 %v537
  %vm758 = vweird.f32 %v752
  %vm759 = vmor %vm757, %vm758
  %v760 = vsel %vm759, %v752, %v756
  %v761 = vand.u32 2147483647, %v537
  %vm762 = vcmp.eq.f32.partialorder %v761, 8.507059e+37
  %v763 = vand.u32 %v537, 2147483648
  %v764 = vor.u32 1.1754944e-38, %v763
  %v765 = vsel %vm762, %v764, %v760
  %v766 = vmul.f32 %v624, %v765
  %v767 = vrcp.pop %v539
  %v768 = vmul.f32 %v539, %v767
  %v769 = vsub.f32 1.0, %v768
  %v770 = vmul.f32 %v767, %v769
  %v771 = vadd.f32 %v767, %v770
  %vm772 = vweird.f32 %v539
  %vm773 = vweird.f32 %v767
  %vm774 = vmor %vm772, %vm773
  %v775 = vsel %vm774, %v767, %v771
  %v776 = vand.u32 2147483647, %v539
  %vm777 = vcmp.eq.f32.partialorder %v776, 8.507059e+37
  %v778 = vand.u32 %v539, 2147483648
  %v779 = vor.u32 1.1754944e-38, %v778
  %v780 = vsel %vm777, %v779, %v775
  %v781 = vmul.f32 %v625, %v780
  %v782 = vrcp.pop %v541
  %v783 = vmul.f32 %v541, %v782
  %v784 = vsub.f32 1.0, %v783
  %v785 = vmul.f32 %v782, %v784
  %v786 = vadd.f32 %v782, %v785
  %vm787 = vweird.f32 %v541
  %vm788 = vweird.f32 %v782
  %vm789 = vmor %vm787, %vm788
  %v790 = vsel %vm789, %v782, %v786
  %v791 = vand.u32 2147483647, %v541
  %vm792 = vcmp.eq.f32.partialorder %v791, 8.507059e+37
  %v793 = vand.u32 %v541, 2147483648
  %v794 = vor.u32 1.1754944e-38, %v793
  %v795 = vsel %vm792, %v794, %v790
  %v796 = vmul.f32 %v626, %v795
  %v797 = vrcp.pop %v543
  %v798 = vmul.f32 %v543, %v797
  %v799 = vsub.f32 1.0, %v798
  %v800 = vmul.f32 %v797, %v799
  %v801 = vadd.f32 %v797, %v800
  %vm802 = vweird.f32 %v543
  %vm803 = vweird.f32 %v797
  %vm804 = vmor %vm802, %vm803
  %v805 = vsel %vm804, %v797, %v801
  %v806 = vand.u32 2147483647, %v543
  %vm807 = vcmp.eq.f32.partialorder %v806, 8.507059e+37
  %v808 = vand.u32 %v543, 2147483648
  %v809 = vor.u32 1.1754944e-38, %v808
  %v810 = vsel %vm807, %v809, %v805
  %v811 = vmul.f32 %v627, %v810
  %v812 = vrcp.pop %v545
  %v813 = vmul.f32 %v545, %v812
  %v814 = vsub.f32 1.0, %v813
  %v815 = vmul.f32 %v812, %v814
  %v816 = vadd.f32 %v812, %v815
  %vm817 = vweird.f32 %v545
  %vm818 = vweird.f32 %v812
  %vm819 = vmor %vm817, %vm818
  %v820 = vsel %vm819, %v812, %v816
  %v821 = vand.u32 2147483647, %v545
  %vm822 = vcmp.eq.f32.partialorder %v821, 8.507059e+37
  %v823 = vand.u32 %v545, 2147483648
  %v824 = vor.u32 1.1754944e-38, %v823
  %v825 = vsel %vm822, %v824, %v820
  %v826 = vmul.f32 %v628, %v825
  %v827 = vrcp.pop %v547
  %v828 = vmul.f32 %v547, %v827
  %v829 = vsub.f32 1.0, %v828
  %v830 = vmul.f32 %v827, %v829
  %v831 = vadd.f32 %v827, %v830
  %vm832 = vweird.f32 %v547
  %vm833 = vweird.f32 %v827
  %vm834 = vmor %vm832, %vm833
  %v835 = vsel %vm834, %v827, %v831
  %v836 = vand.u32 2147483647, %v547
  %vm837 = vcmp.eq.f32.partialorder %v836, 8.507059e+37
  %v838 = vand.u32 %v547, 2147483648
  %v839 = vor.u32 1.1754944e-38, %v838
  %v840 = vsel %vm837, %v839, %v835
  %v841 = vmul.f32 %v629, %v840
  %v842 = vrcp.pop %v549
  %v843 = vmul.f32 %v549, %v842
  %v844 = vsub.f32 1.0, %v843
  %v845 = vmul.f32 %v842, %v844
  %v846 = vadd.f32 %v842, %v845
  %vm847 = vweird.f32 %v549
  %vm848 = vweird.f32 %v842
  %vm849 = vmor %vm847, %vm848
  %v850 = vsel %vm849, %v842, %v846
  %v851 = vand.u32 2147483647, %v549
  %vm852 = vcmp.eq.f32.partialorder %v851, 8.507059e+37
  %v853 = vand.u32 %v549, 2147483648
  %v854 = vor.u32 1.1754944e-38, %v853
  %v855 = vsel %vm852, %v854, %v850
  %v856 = vmul.f32 %v630, %v855
  %v857 = vrcp.pop %v551
  %v858 = vmul.f32 %v551, %v857
  %v859 = vsub.f32 1.0, %v858
  %v860 = vmul.f32 %v857, %v859
  %v861 = vadd.f32 %v857, %v860
  %vm862 = vweird.f32 %v551
  %vm863 = vweird.f32 %v857
  %vm864 = vmor %vm862, %vm863
  %v865 = vsel %vm864, %v857, %v861
  %v866 = vand.u32 2147483647, %v551
  %vm867 = vcmp.eq.f32.partialorder %v866, 8.507059e+37
  %v868 = vand.u32 %v551, 2147483648
  %v869 = vor.u32 1.1754944e-38, %v868
  %v870 = vsel %vm867, %v869, %v865
  %v871 = vmul.f32 %v631, %v870
  %v872 = vmul.f32 %v646, -1.0
  %v873 = vmul.f32 %v661, -1.0
  %v874 = vmul.f32 %v676, -1.0
  %v875 = vmul.f32 %v691, -1.0
  %v876 = vmul.f32 %v706, -1.0
  %v877 = vmul.f32 %v721, -1.0
  %v878 = vmul.f32 %v736, -1.0
  %v879 = vmul.f32 %v751, -1.0
  %v880 = vmul.f32 %v766, -1.0
  %v881 = vmul.f32 %v781, -1.0
  %v882 = vmul.f32 %v796, -1.0
  %v883 = vmul.f32 %v811, -1.0
  %v884 = vmul.f32 %v826, -1.0
  %v885 = vmul.f32 %v841, -1.0
  %v886 = vmul.f32 %v856, -1.0
  %v887 = vmul.f32 %v871, -1.0
  %vm888 = vcmp.lt.s32.totalorder %v149, 16
  %vm889 = vcmp.lt.s32.totalorder %v150, 16
  %vm890 = vcmp.lt.s32.totalorder %v151, 16
  %vm891 = vcmp.lt.s32.totalorder %v152, 16
  %vm892 = vcmp.lt.s32.totalorder %v153, 16
  %vm893 = vcmp.lt.s32.totalorder %v154, 16
  %vm894 = vcmp.lt.s32.totalorder %v155, 16
  %vm895 = vcmp.lt.s32.totalorder %v156, 16
  %vm896 = vcmp.lt.s32.totalorder %v157, 16
  %vm897 = vcmp.lt.s32.totalorder %v158, 16
  %vm898 = vcmp.lt.s32.totalorder %v159, 16
  %vm899 = vcmp.lt.s32.totalorder %v160, 16
  %vm900 = vcmp.lt.s32.totalorder %v161, 16
  %vm901 = vcmp.lt.s32.totalorder %v162, 16
  %vm902 = vcmp.lt.s32.totalorder %v163, 16
  %vm903 = vcmp.lt.s32.totalorder %v164, 16
  %v904 = vsel %vm888, %v872, 0.0
  %v905 = vsel %vm889, %v873, 0.0
  %v906 = vsel %vm890, %v874, 0.0
  %v907 = vsel %vm891, %v875, 0.0
  %v908 = vsel %vm892, %v876, 0.0
  %v909 = vsel %vm893, %v877, 0.0
  %v910 = vsel %vm894, %v878, 0.0
  %v911 = vsel %vm895, %v879, 0.0
  %v912 = vsel %vm896, %v880, 0.0
  %v913 = vsel %vm897, %v881, 0.0
  %v914 = vsel %vm898, %v882, 0.0
  %v915 = vsel %vm899, %v883, 0.0
  %v916 = vsel %vm900, %v884, 0.0
  %v917 = vsel %vm901, %v885, 0.0
  %v918 = vsel %vm902, %v886, 0.0
  %v919 = vsel %vm903, %v887, 0.0
  %vm920 = vcmask 7168
  %921 = vst.msk [vmem:[%s3] sm:$0xff] %vm920, %v904
  %922 = vst.msk [vmem:[%s3 + $0x8] sm:$0xff] %vm920, %v905
  %923 = vst.msk [vmem:[%s3 + $0x10] sm:$0xff] %vm920, %v906
  %924 = vst.msk [vmem:[%s3 + $0x18] sm:$0xff] %vm920, %v907
  %925 = vst.msk [vmem:[%s3 + $0x20] sm:$0xff] %vm920, %v908
  %926 = vst.msk [vmem:[%s3 + $0x28] sm:$0xff] %vm920, %v909
  %927 = vst.msk [vmem:[%s3 + $0x30] sm:$0xff] %vm920, %v910
  %928 = vst.msk [vmem:[%s3 + $0x38] sm:$0xff] %vm920, %v911
  %929 = vst.msk [vmem:[%s3 + $0x40] sm:$0xff] %vm920, %v912
  %930 = vst.msk [vmem:[%s3 + $0x48] sm:$0xff] %vm920, %v913
  %931 = vst.msk [vmem:[%s3 + $0x50] sm:$0xff] %vm920, %v914
  %932 = vst.msk [vmem:[%s3 + $0x58] sm:$0xff] %vm920, %v915
  %933 = vst.msk [vmem:[%s3 + $0x60] sm:$0xff] %vm920, %v916
  %934 = vst.msk [vmem:[%s3 + $0x68] sm:$0xff] %vm920, %v917
  %935 = vst.msk [vmem:[%s3 + $0x70] sm:$0xff] %vm920, %v918
  %936 = vst.msk [vmem:[%s3 + $0x78] sm:$0xff] %vm920, %v919
  // Predicated region
  $region14: #{tpu_custom_call.1} parent=0 // pred_check
    _
  $region15: #{tpu_custom_call.1} parent=0 // pred_check_branch
    %938 = sbr.rel (0) target = $region17
  $region16: #{tpu_custom_call.1} parent=0 // pred_region
    _
  $region17: #{tpu_custom_call.1} parent=0 // pred_fallthru
    _
  // Predicated region
  $region18: #{tpu_custom_call.1} parent=0 // pred_check
    _
  $region19: #{tpu_custom_call.1} parent=0 // pred_check_branch
    %940 = sbr.rel (0) target = $region21
  $region20: #{tpu_custom_call.1} parent=0 // pred_region
    _
  $region21: #{tpu_custom_call.1} parent=0 // pred_fallthru
    _

</llo_original>
